<compile_context>
chip_gen: v7x
topology: tpu7x:2x2x1
jax: 0.10.0
libtpu: 0.0.40
codegen_flags: <defaults>
</compile_context>

<pallas_src>
import functools
import numpy as np
import jax
import jax.numpy as jnp
from jax.experimental import pallas as pl
from jax.experimental.pallas import tpu as pltpu


# --------------------------------------------------------------------------
# Anchor generation (deterministic numpy glue, identical to py-faster-rcnn).
# --------------------------------------------------------------------------
def _whctrs(anchor):
    w = anchor[2] - anchor[0] + 1
    h = anchor[3] - anchor[1] + 1
    x_ctr = anchor[0] + 0.5 * (w - 1)
    y_ctr = anchor[1] + 0.5 * (h - 1)
    return w, h, x_ctr, y_ctr


def _mkanchors(ws, hs, x_ctr, y_ctr):
    ws = ws[:, np.newaxis]
    hs = hs[:, np.newaxis]
    return np.hstack((x_ctr - 0.5 * (ws - 1),
                      y_ctr - 0.5 * (hs - 1),
                      x_ctr + 0.5 * (ws - 1),
                      y_ctr + 0.5 * (hs - 1)))


def _ratio_enum(anchor, ratios):
    w, h, x_ctr, y_ctr = _whctrs(anchor)
    size = w * h
    size_ratios = size / ratios
    ws = np.round(np.sqrt(size_ratios))
    hs = np.round(ws * ratios)
    return _mkanchors(ws, hs, x_ctr, y_ctr)


def _scale_enum(anchor, scales):
    w, h, x_ctr, y_ctr = _whctrs(anchor)
    ws = w * scales
    hs = h * scales
    return _mkanchors(ws, hs, x_ctr, y_ctr)


def generate_anchors(base_size=16, ratios=np.array([0.5, 1, 2]),
                     scales=2 ** np.arange(3, 6)):
    base_anchor = np.array([1, 1, base_size, base_size], dtype=np.float64) - 1
    ratio_anchors = _ratio_enum(base_anchor, ratios)
    anchors = np.vstack([_scale_enum(ratio_anchors[i, :], scales)
                         for i in range(ratio_anchors.shape[0])])
    return anchors.astype(np.float32)


# --------------------------------------------------------------------------
# Pallas kernel: fused bbox_transform_inv + clip_boxes on dense (8,128) planes.
# Anchor geometry (w, h, cx, cy) is precomputed in the wrapper; the kernel only
# does the delta decode + clip (~20 VALU ops / vreg, exp rides the EUP slot).
# --------------------------------------------------------------------------
def _bbox_transform_clip_kernel(lims_ref, anc_ref, dlt_ref, out_ref):
    # lims_ref : SMEM (B, 2)            rows = [im_w - 1, im_h - 1] per image
    # anc_ref  : VMEM (bb, 4, S, 128)   planes = w, h, cx, cy (gathered top-k)
    # dlt_ref  : VMEM (bb, 4, S, 128)   planes = dx, dy, dw, dh (gathered top-k)
    # out_ref  : VMEM (bb, 4, S, 128)   planes = clipped x1, y1, x2, y2
    g = pl.program_id(0)
    nb = out_ref.shape[0]                 # images folded into this grid step
    for j in range(nb):                   # static unroll; nb is small
        b = g * nb + j                    # global image index -> SMEM scalars
        xmax = lims_ref[b, 0]
        ymax = lims_ref[b, 1]

        w, h = anc_ref[j, 0], anc_ref[j, 1]
        cx, cy = anc_ref[j, 2], anc_ref[j, 3]
        dx, dy = dlt_ref[j, 0], dlt_ref[j, 1]
        dw, dh = dlt_ref[j, 2], dlt_ref[j, 3]

        pcx = dx * w + cx
        pcy = dy * h + cy
        # exp() rides the EUP slot and is free under the VPU/store bottleneck.
        half_pw = 0.5 * (jnp.exp(dw) * w)
        half_ph = 0.5 * (jnp.exp(dh) * h)

        out_ref[j, 0] = jnp.clip(pcx - half_pw, 0.0, xmax)
        out_ref[j, 1] = jnp.clip(pcy - half_ph, 0.0, ymax)
        out_ref[j, 2] = jnp.clip(pcx + half_pw, 0.0, xmax)
        out_ref[j, 3] = jnp.clip(pcy + half_ph, 0.0, ymax)


def bbox_transform_clip(lims, anchors_p4, deltas_p4):
    """lims: (B, 2) [xmax, ymax]; anchors_p4 / deltas_p4: (B, 4, S, 128)
    -> (B, 4, S, 128) clipped proposals (x1, y1, x2, y2 planes)."""
    B, _, S, _ = deltas_p4.shape
    # Fold as many images as fit comfortably in VMEM into one grid step: after
    # select-then-transform each image is only 4*S*128*4 bytes per tensor, so
    # the whole batch typically rides in a single step (amortizes the per-step
    # overhead on single-core v5e/v6e, one DMA in/out).  Budget keeps headroom
    # for double-buffering and v7x's smaller (32 MiB scoped) VMEM.
    per_image_bytes = 3 * 4 * S * 128 * 4            # anchors + deltas + out
    budget = 8 * 1024 * 1024
    bb = B
    while bb > 1 and (bb * per_image_bytes > budget or B % bb != 0):
        bb -= 1
    grid = (B // bb,)
    # TODO(synk): on v7x a CORE_PARALLEL split of this axis (or of S) would use
    # both TensorCores; kept "parallel" here since the post-select kernel is
    # tiny and core_parallel support varies across chips.
    return pl.pallas_call(
        _bbox_transform_clip_kernel,
        out_shape=jax.ShapeDtypeStruct((B, 4, S, 128), jnp.float32),
        grid=grid,
        in_specs=[
            # small per-image clip limits live in SMEM (scalar path, no DMA tile)
            pl.BlockSpec(memory_space=pltpu.MemorySpace.SMEM),
            pl.BlockSpec((bb, 4, S, 128), lambda g: (g, 0, 0, 0)),
            pl.BlockSpec((bb, 4, S, 128), lambda g: (g, 0, 0, 0)),
        ],
        out_specs=pl.BlockSpec((bb, 4, S, 128), lambda g: (g, 0, 0, 0)),
        compiler_params=pltpu.CompilerParams(
            dimension_semantics=("parallel",)),
    )(lims, anchors_p4, deltas_p4)


# --------------------------------------------------------------------------
# Batched greedy NMS + post-NMS select (plain JAX, vmapped over the batch).
# IoU rows are computed inside the loop -> O(M) memory instead of O(M^2).
# --------------------------------------------------------------------------
def _make_nms_select(nms_thresh, post_nms_topN):
    def nms_select_single(boxes_p):
        # boxes_p: (4, M) planar boxes, columns sorted by score descending.
        M = boxes_p.shape[1]
        x1, y1, x2, y2 = boxes_p[0], boxes_p[1], boxes_p[2], boxes_p[3]
        areas = (x2 - x1 + 1.0) * (y2 - y1 + 1.0)
        idx = jnp.arange(M)

        # TODO(synk): greedy NMS is inherently sequential (data-dependent
        # suppression chain); at production pre_nms_topN this loop should
        # become a tiled Pallas kernel (boxes in VMEM, suppression bitmask in
        # scratch).  Kept as a vmapped fori_loop that builds one IoU row per
        # step so no (M, M) matrix is ever materialized.
        def body(i, suppressed):
            xx1 = jnp.maximum(x1[i], x1)
            yy1 = jnp.maximum(y1[i], y1)
            xx2 = jnp.minimum(x2[i], x2)
            yy2 = jnp.minimum(y2[i], y2)
            w = jnp.maximum(0.0, xx2 - xx1 + 1.0)
            h = jnp.maximum(0.0, yy2 - yy1 + 1.0)
            inter = w * h
            iou_row = inter / (areas[i] + areas - inter)
            sup_i = suppressed[i]
            return suppressed | ((~sup_i) & (iou_row > nms_thresh) & (idx > i))

        suppressed = jax.lax.fori_loop(0, M, body, jnp.zeros((M,), dtype=bool))
        keep = ~suppressed

        P = post_nms_topN
        take = min(P, M)
        order_keep = jnp.argsort(jnp.where(keep, idx, M + idx))  # kept first, in order
        props_sel = boxes_p[:, order_keep[:take]]                 # (4, take)
        if take < P:
            props_sel = jnp.pad(props_sel, ((0, 0), (0, P - take)))
        num_keep = jnp.sum(keep.astype(jnp.int32))
        valid = jnp.arange(P) < jnp.minimum(num_keep, P)
        return jnp.where(valid[None, :], props_sel, 0.0)          # (4, P)

    return nms_select_single


# --------------------------------------------------------------------------
# Full _ProposalLayer.forward
# --------------------------------------------------------------------------
@functools.partial(jax.jit, static_argnames=("feat_stride", "pre_nms_topN",
                                             "post_nms_topN", "nms_thresh"))
def proposal_layer_forward(rpn_cls_prob, rpn_bbox_pred, im_info, base_anchors,
                           feat_stride, pre_nms_topN, post_nms_topN, nms_thresh):
    B = rpn_bbox_pred.shape[0]
    A = base_anchors.shape[0]
    H, W = rpn_cls_prob.shape[2], rpn_cls_prob.shape[3]
    K = H * W
    N = K * A

    # objectness scores, anchor ordering (a, h, w): pure reshape, no transpose.
    scores = rpn_cls_prob[:, A:, :, :].reshape(B, N)

    # bbox deltas in coord-planar layout (B, 4, N), same (a, h, w) ordering.
    # channel c = a*4 + coord -> view as (B, A, 4, H, W) and swap the two small
    # outer axes; contiguous H*W blocks move, A=9 never becomes innermost.
    deltas_planar = jnp.transpose(
        rpn_bbox_pred.reshape(B, A, 4, H, W), (0, 2, 1, 3, 4)).reshape(B, 4, N)

    # anchor geometry planes (w, h, cx, cy): batch-invariant, built once here
    # in (a, h, w) ordering; the kernel never recomputes them.
    shift_x = jnp.arange(W, dtype=jnp.float32) * feat_stride
    shift_y = jnp.arange(H, dtype=jnp.float32) * feat_stride
    sx, sy = jnp.meshgrid(shift_x, shift_y)
    shifts = jnp.stack([sx.ravel(), sy.ravel(), sx.ravel(), sy.ravel()], axis=1)
    anchors = (base_anchors[:, None, :] + shifts[None, :, :]).reshape(N, 4)
    a_w = anchors[:, 2] - anchors[:, 0] + 1.0
    a_h = anchors[:, 3] - anchors[:, 1] + 1.0
    a_cx = anchors[:, 0] + 0.5 * a_w
    a_cy = anchors[:, 1] + 0.5 * a_h
    anchors_geo = jnp.stack([a_w, a_h, a_cx, a_cy], axis=0)     # (4, N)

    # pre-NMS: pick the top-M scores FIRST, then transform only those boxes.
    # (Reference compares pre_nms_topN against the full tensor numel but
    #  PyTorch slicing truncates to N per image, so effective M = min(., N).)
    total = B * N
    M = min(pre_nms_topN, N) if (0 < pre_nms_topN < total) else N
    _, order = jax.lax.top_k(scores, M)                          # (B, M)
    deltas_sel = jnp.take_along_axis(deltas_planar, order[:, None, :],
                                     axis=2)                     # (B, 4, M)
    anchors_sel = jnp.transpose(jnp.take(anchors_geo, order, axis=1),
                                (1, 0, 2))                       # (B, 4, M)

    # pad M to a multiple of 8*128 so every plane is dense full (8,128) vregs.
    Mpad = ((M + 1023) // 1024) * 1024
    pad = Mpad - M
    if pad:
        deltas_sel = jnp.pad(deltas_sel, ((0, 0), (0, 0), (0, pad)))
        anchors_sel = jnp.pad(anchors_sel, ((0, 0), (0, 0), (0, pad)))
    S = Mpad // 128
    deltas_p4 = deltas_sel.reshape(B, 4, S, 128)
    anchors_p4 = anchors_sel.reshape(B, 4, S, 128)

    # per-image clip limits [im_w - 1, im_h - 1]  (im_info = [height, width, scale])
    lims = jnp.stack([im_info[:, 1] - 1.0, im_info[:, 0] - 1.0],
                     axis=1).astype(jnp.float32)                 # (B, 2)

    proposals_p = bbox_transform_clip(lims, anchors_p4, deltas_p4)
    proposals_p = proposals_p.reshape(B, 4, Mpad)[:, :, :M]      # drop pad cols

    # batched NMS + post-NMS select (vmapped over the batch)
    nms_select = _make_nms_select(nms_thresh, post_nms_topN)
    props_out_p = jax.vmap(nms_select)(proposals_p)              # (B, 4, P)

    # NOTE: RPN_MIN_SIZE filtering is defined but not used in the reference
    # forward path, so it is intentionally omitted here too.
    P = post_nms_topN
    boxes_out = jnp.transpose(props_out_p, (0, 2, 1))            # (B, P, 4)
    batch_col = jnp.broadcast_to(
        jnp.arange(B, dtype=jnp.float32)[:, None, None], (B, P, 1))
    return jnp.concatenate([batch_col, boxes_out], axis=2)       # (B, P, 5)


# --------------------------------------------------------------------------
if __name__ == "__main__":
    # cfg ("opt") values, deterministic in-script
    FEAT_STRIDE = 16
    SCALES = [8, 16, 32]
    RATIOS = [0.5, 1.0, 2.0]
    PRE_NMS_TOP_N = 64
    POST_NMS_TOP_N = 16
    NMS_THRESH = 0.7
    RPN_MIN_SIZE = 16  # defined by the module but unused in this forward path

    base_anchors = jnp.asarray(
        generate_anchors(scales=np.array(SCALES), ratios=np.array(RATIOS)),
        dtype=jnp.float32)
    A = base_anchors.shape[0]          # 9 anchors

    B, H, W = 2, 16, 16                # small synthetic RPN feature map
    key = jax.random.PRNGKey(0)
    k1, k2 = jax.random.split(key)
    rpn_cls_prob = jax.random.uniform(k1, (B, 2 * A, H, W), dtype=jnp.float32)
    rpn_bbox_pred = 0.1 * jax.random.normal(k2, (B, 4 * A, H, W), dtype=jnp.float32)
    im_info = jnp.array([[H * FEAT_STRIDE, W * FEAT_STRIDE, 1.0]] * B,
                        dtype=jnp.float32)

    out = proposal_layer_forward(rpn_cls_prob, rpn_bbox_pred, im_info,
                                 base_anchors, FEAT_STRIDE,
                                 PRE_NMS_TOP_N, POST_NMS_TOP_N, NMS_THRESH)
    out = jax.block_until_ready(out)
    assert out.shape == (B, POST_NMS_TOP_N, 5)
    assert out.dtype == jnp.float32
    assert bool(jnp.all(jnp.isfinite(out)))
    print("KERNEL_OK")
</pallas_src>

<mosaic_0001>
module attributes {stable_mosaic.version = 11 : i64} {
  func.func @_bbox_transform_clip_kernel(%arg0: i32, %arg1: memref<2x2xf32, #tpu.memory_space<smem>>, %arg2: memref<2x4x8x128xf32, #tpu.memory_space<vmem>>, %arg3: memref<2x4x8x128xf32, #tpu.memory_space<vmem>>, %arg4: memref<2x4x8x128xf32, #tpu.memory_space<vmem>>) attributes {dimension_semantics = [#tpu.dimension_semantics<parallel>], iteration_bounds = array<i64: 1>, scalar_prefetch = 0 : i64, scratch_operands = 0 : i64, tpu.core_type = #tpu.core_type<tc>, window_params = [{transform_indices = @transform_0, window_bounds = array<i64: 2, 2>}, {transform_indices = @transform_1, window_bounds = array<i64: 2, 4, 8, 128>}, {transform_indices = @transform_2, window_bounds = array<i64: 2, 4, 8, 128>}, {transform_indices = @transform_3, window_bounds = array<i64: 2, 4, 8, 128>}]} {
    %c2_i32 = arith.constant 2 : i32
    %0 = arith.muli %arg0, %c2_i32 : i32
    %c0_i32 = arith.constant 0 : i32
    %1 = arith.addi %0, %c0_i32 : i32
    %2 = arith.index_cast %1 : i32 to index
    %c0 = arith.constant 0 : index
    %3 = memref.load %arg1[%2, %c0] : memref<2x2xf32, #tpu.memory_space<smem>>
    %4 = arith.index_cast %1 : i32 to index
    %c1 = arith.constant 1 : index
    %5 = memref.load %arg1[%4, %c1] : memref<2x2xf32, #tpu.memory_space<smem>>
    %c0_0 = arith.constant 0 : index
    %c0_1 = arith.constant 0 : index
    %c0_2 = arith.constant 0 : index
    %c0_3 = arith.constant 0 : index
    %6 = vector.load %arg2[%c0_0, %c0_1, %c0_2, %c0_3] : memref<2x4x8x128xf32, #tpu.memory_space<vmem>>, vector<1x1x8x128xf32>
    %7 = vector.shape_cast %6 : vector<1x1x8x128xf32> to vector<8x128xf32>
    %c0_4 = arith.constant 0 : index
    %c1_5 = arith.constant 1 : index
    %c0_6 = arith.constant 0 : index
    %c0_7 = arith.constant 0 : index
    %8 = vector.load %arg2[%c0_4, %c1_5, %c0_6, %c0_7] : memref<2x4x8x128xf32, #tpu.memory_space<vmem>>, vector<1x1x8x128xf32>
    %9 = vector.shape_cast %8 : vector<1x1x8x128xf32> to vector<8x128xf32>
    %c0_8 = arith.constant 0 : index
    %c2 = arith.constant 2 : index
    %c0_9 = arith.constant 0 : index
    %c0_10 = arith.constant 0 : index
    %10 = vector.load %arg2[%c0_8, %c2, %c0_9, %c0_10] : memref<2x4x8x128xf32, #tpu.memory_space<vmem>>, vector<1x1x8x128xf32>
    %11 = vector.shape_cast %10 : vector<1x1x8x128xf32> to vector<8x128xf32>
    %c0_11 = arith.constant 0 : index
    %c3 = arith.constant 3 : index
    %c0_12 = arith.constant 0 : index
    %c0_13 = arith.constant 0 : index
    %12 = vector.load %arg2[%c0_11, %c3, %c0_12, %c0_13] : memref<2x4x8x128xf32, #tpu.memory_space<vmem>>, vector<1x1x8x128xf32>
    %13 = vector.shape_cast %12 : vector<1x1x8x128xf32> to vector<8x128xf32>
    %c0_14 = arith.constant 0 : index
    %c0_15 = arith.constant 0 : index
    %c0_16 = arith.constant 0 : index
    %c0_17 = arith.constant 0 : index
    %14 = vector.load %arg3[%c0_14, %c0_15, %c0_16, %c0_17] : memref<2x4x8x128xf32, #tpu.memory_space<vmem>>, vector<1x1x8x128xf32>
    %15 = vector.shape_cast %14 : vector<1x1x8x128xf32> to vector<8x128xf32>
    %c0_18 = arith.constant 0 : index
    %c1_19 = arith.constant 1 : index
    %c0_20 = arith.constant 0 : index
    %c0_21 = arith.constant 0 : index
    %16 = vector.load %arg3[%c0_18, %c1_19, %c0_20, %c0_21] : memref<2x4x8x128xf32, #tpu.memory_space<vmem>>, vector<1x1x8x128xf32>
    %17 = vector.shape_cast %16 : vector<1x1x8x128xf32> to vector<8x128xf32>
    %c0_22 = arith.constant 0 : index
    %c2_23 = arith.constant 2 : index
    %c0_24 = arith.constant 0 : index
    %c0_25 = arith.constant 0 : index
    %18 = vector.load %arg3[%c0_22, %c2_23, %c0_24, %c0_25] : memref<2x4x8x128xf32, #tpu.memory_space<vmem>>, vector<1x1x8x128xf32>
    %19 = vector.shape_cast %18 : vector<1x1x8x128xf32> to vector<8x128xf32>
    %c0_26 = arith.constant 0 : index
    %c3_27 = arith.constant 3 : index
    %c0_28 = arith.constant 0 : index
    %c0_29 = arith.constant 0 : index
    %20 = vector.load %arg3[%c0_26, %c3_27, %c0_28, %c0_29] : memref<2x4x8x128xf32, #tpu.memory_space<vmem>>, vector<1x1x8x128xf32>
    %21 = vector.shape_cast %20 : vector<1x1x8x128xf32> to vector<8x128xf32>
    %22 = arith.mulf %15, %7 : vector<8x128xf32>
    %23 = arith.addf %22, %11 : vector<8x128xf32>
    %24 = arith.mulf %17, %9 : vector<8x128xf32>
    %25 = arith.addf %24, %13 : vector<8x128xf32>
    %26 = math.exp %19 : vector<8x128xf32>
    %27 = arith.mulf %26, %7 : vector<8x128xf32>
    %cst = arith.constant 5.000000e-01 : f32
    %28 = vector.broadcast %cst : f32 to vector<8x128xf32>
    %29 = arith.mulf %28, %27 : vector<8x128xf32>
    %30 = math.exp %21 : vector<8x128xf32>
    %31 = arith.mulf %30, %9 : vector<8x128xf32>
    %cst_30 = arith.constant 5.000000e-01 : f32
    %32 = vector.broadcast %cst_30 : f32 to vector<8x128xf32>
    %33 = arith.mulf %32, %31 : vector<8x128xf32>
    %34 = arith.subf %23, %29 : vector<8x128xf32>
    %cst_31 = arith.constant 0.000000e+00 : f32
    %35 = vector.broadcast %cst_31 : f32 to vector<8x128xf32>
    %36 = arith.maximumf %35, %34 : vector<8x128xf32>
    %37 = vector.broadcast %3 : f32 to vector<8x128xf32>
    %38 = arith.minimumf %37, %36 : vector<8x128xf32>
    %c0_32 = arith.constant 0 : index
    %c0_33 = arith.constant 0 : index
    %c0_34 = arith.constant 0 : index
    %c0_35 = arith.constant 0 : index
    %39 = vector.load %arg4[%c0_32, %c0_33, %c0_34, %c0_35] : memref<2x4x8x128xf32, #tpu.memory_space<vmem>>, vector<1x1x8x128xf32>
    %40 = vector.shape_cast %39 : vector<1x1x8x128xf32> to vector<8x128xf32>
    %41 = vector.shape_cast %38 : vector<8x128xf32> to vector<1x1x8x128xf32>
    tpu.vector_store %arg4[%c0_32, %c0_33, %c0_34, %c0_35], %41 {strides = array<i32>} : memref<2x4x8x128xf32, #tpu.memory_space<vmem>>, vector<1x1x8x128xf32>,
    %42 = arith.subf %25, %33 : vector<8x128xf32>
    %cst_36 = arith.constant 0.000000e+00 : f32
    %43 = vector.broadcast %cst_36 : f32 to vector<8x128xf32>
    %44 = arith.maximumf %43, %42 : vector<8x128xf32>
    %45 = vector.broadcast %5 : f32 to vector<8x128xf32>
    %46 = arith.minimumf %45, %44 : vector<8x128xf32>
    %c0_37 = arith.constant 0 : index
    %c1_38 = arith.constant 1 : index
    %c0_39 = arith.constant 0 : index
    %c0_40 = arith.constant 0 : index
    %47 = vector.load %arg4[%c0_37, %c1_38, %c0_39, %c0_40] : memref<2x4x8x128xf32, #tpu.memory_space<vmem>>, vector<1x1x8x128xf32>
    %48 = vector.shape_cast %47 : vector<1x1x8x128xf32> to vector<8x128xf32>
    %49 = vector.shape_cast %46 : vector<8x128xf32> to vector<1x1x8x128xf32>
    tpu.vector_store %arg4[%c0_37, %c1_38, %c0_39, %c0_40], %49 {strides = array<i32>} : memref<2x4x8x128xf32, #tpu.memory_space<vmem>>, vector<1x1x8x128xf32>,
    %50 = arith.addf %23, %29 : vector<8x128xf32>
    %cst_41 = arith.constant 0.000000e+00 : f32
    %51 = vector.broadcast %cst_41 : f32 to vector<8x128xf32>
    %52 = arith.maximumf %51, %50 : vector<8x128xf32>
    %53 = vector.broadcast %3 : f32 to vector<8x128xf32>
    %54 = arith.minimumf %53, %52 : vector<8x128xf32>
    %c0_42 = arith.constant 0 : index
    %c2_43 = arith.constant 2 : index
    %c0_44 = arith.constant 0 : index
    %c0_45 = arith.constant 0 : index
    %55 = vector.load %arg4[%c0_42, %c2_43, %c0_44, %c0_45] : memref<2x4x8x128xf32, #tpu.memory_space<vmem>>, vector<1x1x8x128xf32>
    %56 = vector.shape_cast %55 : vector<1x1x8x128xf32> to vector<8x128xf32>
    %57 = vector.shape_cast %54 : vector<8x128xf32> to vector<1x1x8x128xf32>
    tpu.vector_store %arg4[%c0_42, %c2_43, %c0_44, %c0_45], %57 {strides = array<i32>} : memref<2x4x8x128xf32, #tpu.memory_space<vmem>>, vector<1x1x8x128xf32>,
    %58 = arith.addf %25, %33 : vector<8x128xf32>
    %cst_46 = arith.constant 0.000000e+00 : f32
    %59 = vector.broadcast %cst_46 : f32 to vector<8x128xf32>
    %60 = arith.maximumf %59, %58 : vector<8x128xf32>
    %61 = vector.broadcast %5 : f32 to vector<8x128xf32>
    %62 = arith.minimumf %61, %60 : vector<8x128xf32>
    %c0_47 = arith.constant 0 : index
    %c3_48 = arith.constant 3 : index
    %c0_49 = arith.constant 0 : index
    %c0_50 = arith.constant 0 : index
    %63 = vector.load %arg4[%c0_47, %c3_48, %c0_49, %c0_50] : memref<2x4x8x128xf32, #tpu.memory_space<vmem>>, vector<1x1x8x128xf32>
    %64 = vector.shape_cast %63 : vector<1x1x8x128xf32> to vector<8x128xf32>
    %65 = vector.shape_cast %62 : vector<8x128xf32> to vector<1x1x8x128xf32>
    tpu.vector_store %arg4[%c0_47, %c3_48, %c0_49, %c0_50], %65 {strides = array<i32>} : memref<2x4x8x128xf32, #tpu.memory_space<vmem>>, vector<1x1x8x128xf32>,
    %c2_i32_51 = arith.constant 2 : i32
    %66 = arith.muli %arg0, %c2_i32_51 : i32
    %c1_i32 = arith.constant 1 : i32
    %67 = arith.addi %66, %c1_i32 : i32
    %68 = arith.index_cast %67 : i32 to index
    %c0_52 = arith.constant 0 : index
    %69 = memref.load %arg1[%68, %c0_52] : memref<2x2xf32, #tpu.memory_space<smem>>
    %70 = arith.index_cast %67 : i32 to index
    %c1_53 = arith.constant 1 : index
    %71 = memref.load %arg1[%70, %c1_53] : memref<2x2xf32, #tpu.memory_space<smem>>
    %c1_54 = arith.constant 1 : index
    %c0_55 = arith.constant 0 : index
    %c0_56 = arith.constant 0 : index
    %c0_57 = arith.constant 0 : index
    %72 = vector.load %arg2[%c1_54, %c0_55, %c0_56, %c0_57] : memref<2x4x8x128xf32, #tpu.memory_space<vmem>>, vector<1x1x8x128xf32>
    %73 = vector.shape_cast %72 : vector<1x1x8x128xf32> to vector<8x128xf32>
    %c1_58 = arith.constant 1 : index
    %c1_59 = arith.constant 1 : index
    %c0_60 = arith.constant 0 : index
    %c0_61 = arith.constant 0 : index
    %74 = vector.load %arg2[%c1_58, %c1_59, %c0_60, %c0_61] : memref<2x4x8x128xf32, #tpu.memory_space<vmem>>, vector<1x1x8x128xf32>
    %75 = vector.shape_cast %74 : vector<1x1x8x128xf32> to vector<8x128xf32>
    %c1_62 = arith.constant 1 : index
    %c2_63 = arith.constant 2 : index
    %c0_64 = arith.constant 0 : index
    %c0_65 = arith.constant 0 : index
    %76 = vector.load %arg2[%c1_62, %c2_63, %c0_64, %c0_65] : memref<2x4x8x128xf32, #tpu.memory_space<vmem>>, vector<1x1x8x128xf32>
    %77 = vector.shape_cast %76 : vector<1x1x8x128xf32> to vector<8x128xf32>
    %c1_66 = arith.constant 1 : index
    %c3_67 = arith.constant 3 : index
    %c0_68 = arith.constant 0 : index
    %c0_69 = arith.constant 0 : index
    %78 = vector.load %arg2[%c1_66, %c3_67, %c0_68, %c0_69] : memref<2x4x8x128xf32, #tpu.memory_space<vmem>>, vector<1x1x8x128xf32>
    %79 = vector.shape_cast %78 : vector<1x1x8x128xf32> to vector<8x128xf32>
    %c1_70 = arith.constant 1 : index
    %c0_71 = arith.constant 0 : index
    %c0_72 = arith.constant 0 : index
    %c0_73 = arith.constant 0 : index
    %80 = vector.load %arg3[%c1_70, %c0_71, %c0_72, %c0_73] : memref<2x4x8x128xf32, #tpu.memory_space<vmem>>, vector<1x1x8x128xf32>
    %81 = vector.shape_cast %80 : vector<1x1x8x128xf32> to vector<8x128xf32>
    %c1_74 = arith.constant 1 : index
    %c1_75 = arith.constant 1 : index
    %c0_76 = arith.constant 0 : index
    %c0_77 = arith.constant 0 : index
    %82 = vector.load %arg3[%c1_74, %c1_75, %c0_76, %c0_77] : memref<2x4x8x128xf32, #tpu.memory_space<vmem>>, vector<1x1x8x128xf32>
    %83 = vector.shape_cast %82 : vector<1x1x8x128xf32> to vector<8x128xf32>
    %c1_78 = arith.constant 1 : index
    %c2_79 = arith.constant 2 : index
    %c0_80 = arith.constant 0 : index
    %c0_81 = arith.constant 0 : index
    %84 = vector.load %arg3[%c1_78, %c2_79, %c0_80, %c0_81] : memref<2x4x8x128xf32, #tpu.memory_space<vmem>>, vector<1x1x8x128xf32>
    %85 = vector.shape_cast %84 : vector<1x1x8x128xf32> to vector<8x128xf32>
    %c1_82 = arith.constant 1 : index
    %c3_83 = arith.constant 3 : index
    %c0_84 = arith.constant 0 : index
    %c0_85 = arith.constant 0 : index
    %86 = vector.load %arg3[%c1_82, %c3_83, %c0_84, %c0_85] : memref<2x4x8x128xf32, #tpu.memory_space<vmem>>, vector<1x1x8x128xf32>
    %87 = vector.shape_cast %86 : vector<1x1x8x128xf32> to vector<8x128xf32>
    %88 = arith.mulf %81, %73 : vector<8x128xf32>
    %89 = arith.addf %88, %77 : vector<8x128xf32>
    %90 = arith.mulf %83, %75 : vector<8x128xf32>
    %91 = arith.addf %90, %79 : vector<8x128xf32>
    %92 = math.exp %85 : vector<8x128xf32>
    %93 = arith.mulf %92, %73 : vector<8x128xf32>
    %cst_86 = arith.constant 5.000000e-01 : f32
    %94 = vector.broadcast %cst_86 : f32 to vector<8x128xf32>
    %95 = arith.mulf %94, %93 : vector<8x128xf32>
    %96 = math.exp %87 : vector<8x128xf32>
    %97 = arith.mulf %96, %75 : vector<8x128xf32>
    %cst_87 = arith.constant 5.000000e-01 : f32
    %98 = vector.broadcast %cst_87 : f32 to vector<8x128xf32>
    %99 = arith.mulf %98, %97 : vector<8x128xf32>
    %100 = arith.subf %89, %95 : vector<8x128xf32>
    %cst_88 = arith.constant 0.000000e+00 : f32
    %101 = vector.broadcast %cst_88 : f32 to vector<8x128xf32>
    %102 = arith.maximumf %101, %100 : vector<8x128xf32>
    %103 = vector.broadcast %69 : f32 to vector<8x128xf32>
    %104 = arith.minimumf %103, %102 : vector<8x128xf32>
    %c1_89 = arith.constant 1 : index
    %c0_90 = arith.constant 0 : index
    %c0_91 = arith.constant 0 : index
    %c0_92 = arith.constant 0 : index
    %105 = vector.load %arg4[%c1_89, %c0_90, %c0_91, %c0_92] : memref<2x4x8x128xf32, #tpu.memory_space<vmem>>, vector<1x1x8x128xf32>
    %106 = vector.shape_cast %105 : vector<1x1x8x128xf32> to vector<8x128xf32>
    %107 = vector.shape_cast %104 : vector<8x128xf32> to vector<1x1x8x128xf32>
    tpu.vector_store %arg4[%c1_89, %c0_90, %c0_91, %c0_92], %107 {strides = array<i32>} : memref<2x4x8x128xf32, #tpu.memory_space<vmem>>, vector<1x1x8x128xf32>,
    %108 = arith.subf %91, %99 : vector<8x128xf32>
    %cst_93 = arith.constant 0.000000e+00 : f32
    %109 = vector.broadcast %cst_93 : f32 to vector<8x128xf32>
    %110 = arith.maximumf %109, %108 : vector<8x128xf32>
    %111 = vector.broadcast %71 : f32 to vector<8x128xf32>
    %112 = arith.minimumf %111, %110 : vector<8x128xf32>
    %c1_94 = arith.constant 1 : index
    %c1_95 = arith.constant 1 : index
    %c0_96 = arith.constant 0 : index
    %c0_97 = arith.constant 0 : index
    %113 = vector.load %arg4[%c1_94, %c1_95, %c0_96, %c0_97] : memref<2x4x8x128xf32, #tpu.memory_space<vmem>>, vector<1x1x8x128xf32>
    %114 = vector.shape_cast %113 : vector<1x1x8x128xf32> to vector<8x128xf32>
    %115 = vector.shape_cast %112 : vector<8x128xf32> to vector<1x1x8x128xf32>
    tpu.vector_store %arg4[%c1_94, %c1_95, %c0_96, %c0_97], %115 {strides = array<i32>} : memref<2x4x8x128xf32, #tpu.memory_space<vmem>>, vector<1x1x8x128xf32>,
    %116 = arith.addf %89, %95 : vector<8x128xf32>
    %cst_98 = arith.constant 0.000000e+00 : f32
    %117 = vector.broadcast %cst_98 : f32 to vector<8x128xf32>
    %118 = arith.maximumf %117, %116 : vector<8x128xf32>
    %119 = vector.broadcast %69 : f32 to vector<8x128xf32>
    %120 = arith.minimumf %119, %118 : vector<8x128xf32>
    %c1_99 = arith.constant 1 : index
    %c2_100 = arith.constant 2 : index
    %c0_101 = arith.constant 0 : index
    %c0_102 = arith.constant 0 : index
    %121 = vector.load %arg4[%c1_99, %c2_100, %c0_101, %c0_102] : memref<2x4x8x128xf32, #tpu.memory_space<vmem>>, vector<1x1x8x128xf32>
    %122 = vector.shape_cast %121 : vector<1x1x8x128xf32> to vector<8x128xf32>
    %123 = vector.shape_cast %120 : vector<8x128xf32> to vector<1x1x8x128xf32>
    tpu.vector_store %arg4[%c1_99, %c2_100, %c0_101, %c0_102], %123 {strides = array<i32>} : memref<2x4x8x128xf32, #tpu.memory_space<vmem>>, vector<1x1x8x128xf32>,
    %124 = arith.addf %91, %99 : vector<8x128xf32>
    %cst_103 = arith.constant 0.000000e+00 : f32
    %125 = vector.broadcast %cst_103 : f32 to vector<8x128xf32>
    %126 = arith.maximumf %125, %124 : vector<8x128xf32>
    %127 = vector.broadcast %71 : f32 to vector<8x128xf32>
    %128 = arith.minimumf %127, %126 : vector<8x128xf32>
    %c1_104 = arith.constant 1 : index
    %c3_105 = arith.constant 3 : index
    %c0_106 = arith.constant 0 : index
    %c0_107 = arith.constant 0 : index
    %129 = vector.load %arg4[%c1_104, %c3_105, %c0_106, %c0_107] : memref<2x4x8x128xf32, #tpu.memory_space<vmem>>, vector<1x1x8x128xf32>
    %130 = vector.shape_cast %129 : vector<1x1x8x128xf32> to vector<8x128xf32>
    %131 = vector.shape_cast %128 : vector<8x128xf32> to vector<1x1x8x128xf32>
    tpu.vector_store %arg4[%c1_104, %c3_105, %c0_106, %c0_107], %131 {strides = array<i32>} : memref<2x4x8x128xf32, #tpu.memory_space<vmem>>, vector<1x1x8x128xf32>,
    return
  }
  func.func @transform_0(%arg0: i32) -> (i32, i32) {
    %c0_i32 = arith.constant 0 : i32
    %c0_i32_0 = arith.constant 0 : i32
    %c0_i32_1 = arith.constant 0 : i32
    return %c0_i32, %c0_i32_0 : i32, i32
  }
  func.func @transform_1(%arg0: i32) -> (i32, i32, i32, i32) {
    %c0_i32 = arith.constant 0 : i32
    %c0_i32_0 = arith.constant 0 : i32
    %c0_i32_1 = arith.constant 0 : i32
    %c0_i32_2 = arith.constant 0 : i32
    return %arg0, %c0_i32, %c0_i32_0, %c0_i32_1 : i32, i32, i32, i32
  }
  func.func @transform_2(%arg0: i32) -> (i32, i32, i32, i32) {
    %c0_i32 = arith.constant 0 : i32
    %c0_i32_0 = arith.constant 0 : i32
    %c0_i32_1 = arith.constant 0 : i32
    %c0_i32_2 = arith.constant 0 : i32
    return %arg0, %c0_i32, %c0_i32_0, %c0_i32_1 : i32, i32, i32, i32
  }
  func.func @transform_3(%arg0: i32) -> (i32, i32, i32, i32) {
    %c0_i32 = arith.constant 0 : i32
    %c0_i32_0 = arith.constant 0 : i32
    %c0_i32_1 = arith.constant 0 : i32
    %c0_i32_2 = arith.constant 0 : i32
    return %arg0, %c0_i32, %c0_i32_0, %c0_i32_1 : i32, i32, i32, i32
  }
}

</mosaic_0001>

<llo_original>
// kernel: custom-call.4
$region0: #{custom-call.4}
  %s0 = inlined_call_operand.vmem [shape: pred[2,64], index: 0, kind: output, shape index: {}]

// kernel: proposal_layer_forward.1
$region0: #{proposal_layer_forward.1}
  #allocation0 [shape = 'u32[]', space=smem, size = 0x4, offset = 0x4, fixed_abs, tag = 'smem constant byte address 0x4 - core index']
  #allocation1 [shape = 'u32[144,128]{1,0:T(1,128)}', space=vmem, size = 0x12000, scoped, tag = 'internal scratch']
  %s0 = inlined_call_operand.vmem [shape: f32[2,2], index: 0, kind: input, shape index: {}]
  %s1 = inlined_call_operand.vmem [shape: f32[2,4,8,128], index: 1, kind: input, shape index: {}]
  %s2 = inlined_call_operand.vmem [shape: f32[2,4,8,128], index: 2, kind: input, shape index: {}]
  %s3 = inlined_call_operand.vmem [shape: f32[2,4,8,128], index: 3, kind: output, shape index: {}]
  %s4 = sld [smem:[#allocation0]]
  $region26: #{proposal_layer_forward.1} parent=0
    _
  %s6 = ssub.s32 1, %s4
  %s7 = scalar_select 0, %s6, %s4
  $region1: #{proposal_layer_forward.1} parent=0
    #allocation2 [shape = 'u8[1024]{0}', space=smem, size = 0x400, scoped, tag = 'input window, operand 0, single buffered']
    #allocation3 [shape = 's32[1]{0}', space=sflag, size = 0x4, scoped, tag = 'scoped memory for proposal_layer_forward.1']
    %8 = vsyncpa [#allocation3], 0
    // Predicated region
    $region2: #{proposal_layer_forward.1} parent=1 // pred_check
      _
    $region3: #{proposal_layer_forward.1} parent=1 // pred_check_branch
      %10 = sbr.rel (0) target = $region5
    $region4: #{proposal_layer_forward.1} parent=1 // pred_region
      %s12 = ssub.s32 32, 32
      %13 = vsyncadd [#allocation3], %s12
      %s15 = sshll.u32 %s0, 4
      %s16 = int_to_ptr.vmem [resolvable:$true] %s15
      %18 = dma.vmem_to_smem %s16, 32, [#allocation2], [#allocation3]
    $region5: #{proposal_layer_forward.1} parent=1 // pred_fallthru
      _
    // Predicated region
    $region6: #{proposal_layer_forward.1} parent=1 // pred_check
      _
    $region7: #{proposal_layer_forward.1} parent=1 // pred_check_branch
      %20 = sbr.rel (0) target = $region9
    $region8: #{proposal_layer_forward.1} parent=1 // pred_region
      _
    $region9: #{proposal_layer_forward.1} parent=1 // pred_fallthru
      _
    // Predicated region
    $region10: #{proposal_layer_forward.1} parent=1 // pred_check
      _
    $region11: #{proposal_layer_forward.1} parent=1 // pred_check_branch
      %22 = sbr.rel (0) target = $region13
    $region12: #{proposal_layer_forward.1} parent=1 // pred_region
      _
    $region13: #{proposal_layer_forward.1} parent=1 // pred_fallthru
      _
    // Predicated region
    $region14: #{proposal_layer_forward.1} parent=1 // pred_check
      _
    $region15: #{proposal_layer_forward.1} parent=1 // pred_check_branch
      %24 = sbr.rel (0) target = $region17
    $region16: #{proposal_layer_forward.1} parent=1 // pred_region
      %25 = dma.done [#allocation3], 32
    $region17: #{proposal_layer_forward.1} parent=1 // pred_fallthru
      _
    %26 = sfence
    %s27 = smul.u32 0, 2
    %s28 = smul.u32 %s27, 128
    %s29 = sld [smem:[#allocation2 + %s28]]
    %s30 = sadd.s32 %s28, 1
    %s31 = sld [smem:[#allocation2 + %s30]]
    %v32 = vld [vmem:[%s1] sm:$0xff]
    %s33 = scalar_lea.vmem %s1, 8
    %v34 = vld [vmem:[%s33] sm:$0xff]
    %s35 = scalar_lea.vmem %s1, 16
    %v36 = vld [vmem:[%s35] sm:$0xff]
    %s37 = scalar_lea.vmem %s1, 24
    %v38 = vld [vmem:[%s37] sm:$0xff]
    %v39 = vld [vmem:[%s2] sm:$0xff]
    %s40 = scalar_lea.vmem %s2, 8
    %v41 = vld [vmem:[%s40] sm:$0xff]
    %s42 = scalar_lea.vmem %s2, 16
    %v43 = vld [vmem:[%s42] sm:$0xff]
    %s44 = scalar_lea.vmem %s2, 24
    %v45 = vld [vmem:[%s44] sm:$0xff]
    %v46 = vmul.f32 %v39, %v32
    %v47 = vadd.f32 %v46, %v36
    %v48 = vmul.f32 %v41, %v34
    %v49 = vadd.f32 %v48, %v38
    %v50 = vmul.f32 %v43, 1.442695
    %v51 = vpow.pop %v50
    %v52 = vmul.f32 %v51, %v32
    %v53 = vmul.f32 %v52, 0.5
    %v54 = vmul.f32 %v45, 1.442695
    %v55 = vpow.pop %v54
    %v56 = vmul.f32 %v55, %v34
    %v57 = vmul.f32 %v56, 0.5
    %v58 = vsub.f32 %v47, %v53
    %v59 = vmax.f32 %v58, 0.0
    %v60 = vstv %s29
    %v61 = vmin.f32 %v60, %v59
    %62 = vst [vmem:[%s3] sm:$0xff] %v61
    %v63 = vsub.f32 %v49, %v57
    %v64 = vmax.f32 %v63, 0.0
    %v65 = vstv %s31
    %v66 = vmin.f32 %v65, %v64
    %s67 = scalar_lea.vmem %s3, 8
    %68 = vst [vmem:[%s67] sm:$0xff] %v66
    %v69 = vadd.f32 %v47, %v53
    %v70 = vmax.f32 %v69, 0.0
    %v71 = vmin.f32 %v60, %v70
    %s72 = scalar_lea.vmem %s3, 16
    %73 = vst [vmem:[%s72] sm:$0xff] %v71
    %v74 = vadd.f32 %v49, %v57
    %v75 = vmax.f32 %v74, 0.0
    %v76 = vmin.f32 %v65, %v75
    %s77 = scalar_lea.vmem %s3, 24
    %78 = vst [vmem:[%s77] sm:$0xff] %v76
    %s79 = sadd.s32 %s27, 1
    %s80 = smul.u32 %s79, 128
    %s81 = sld [smem:[#allocation2 + %s80]]
    %s82 = sadd.s32 %s80, 1
    %s83 = sld [smem:[#allocation2 + %s82]]
    %s84 = scalar_lea.vmem %s1, 32
    %v85 = vld [vmem:[%s84] sm:$0xff]
    %s86 = scalar_lea.vmem %s1, 40
    %v87 = vld [vmem:[%s86] sm:$0xff]
    %s88 = scalar_lea.vmem %s1, 48
    %v89 = vld [vmem:[%s88] sm:$0xff]
    %s90 = scalar_lea.vmem %s1, 56
    %v91 = vld [vmem:[%s90] sm:$0xff]
    %s92 = scalar_lea.vmem %s2, 32
    %v93 = vld [vmem:[%s92] sm:$0xff]
    %s94 = scalar_lea.vmem %s2, 40
    %v95 = vld [vmem:[%s94] sm:$0xff]
    %s96 = scalar_lea.vmem %s2, 48
    %v97 = vld [vmem:[%s96] sm:$0xff]
    %s98 = scalar_lea.vmem %s2, 56
    %v99 = vld [vmem:[%s98] sm:$0xff]
    %v100 = vmul.f32 %v93, %v85
    %v101 = vadd.f32 %v100, %v89
    %v102 = vmul.f32 %v95, %v87
    %v103 = vadd.f32 %v102, %v91
    %v104 = vmul.f32 %v97, 1.442695
    %v105 = vpow.pop %v104
    %v106 = vmul.f32 %v105, %v85
    %v107 = vmul.f32 %v106, 0.5
    %v108 = vmul.f32 %v99, 1.442695
    %v109 = vpow.pop %v108
    %v110 = vmul.f32 %v109, %v87
    %v111 = vmul.f32 %v110, 0.5
    %v112 = vsub.f32 %v101, %v107
    %v113 = vmax.f32 %v112, 0.0
    %v114 = vstv %s81
    %v115 = vmin.f32 %v114, %v113
    %s116 = scalar_lea.vmem %s3, 32
    %117 = vst [vmem:[%s116] sm:$0xff] %v115
    %v118 = vsub.f32 %v103, %v111
    %v119 = vmax.f32 %v118, 0.0
    %v120 = vstv %s83
    %v121 = vmin.f32 %v120, %v119
    %s122 = scalar_lea.vmem %s3, 40
    %123 = vst [vmem:[%s122] sm:$0xff] %v121
    %v124 = vadd.f32 %v101, %v107
    %v125 = vmax.f32 %v124, 0.0
    %v126 = vmin.f32 %v114, %v125
    %s127 = scalar_lea.vmem %s3, 48
    %128 = vst [vmem:[%s127] sm:$0xff] %v126
    %v129 = vadd.f32 %v103, %v111
    %v130 = vmax.f32 %v129, 0.0
    %v131 = vmin.f32 %v120, %v130
    %s132 = scalar_lea.vmem %s3, 56
    %133 = vst [vmem:[%s132] sm:$0xff] %v131
    // Predicated region
    $region18: #{proposal_layer_forward.1} parent=1 // pred_check
      _
    $region19: #{proposal_layer_forward.1} parent=1 // pred_check_branch
      %135 = sbr.rel (0) target = $region21
    $region20: #{proposal_layer_forward.1} parent=1 // pred_region
      _
    $region21: #{proposal_layer_forward.1} parent=1 // pred_fallthru
      _
    // Predicated region
    $region22: #{proposal_layer_forward.1} parent=1 // pred_check
      _
    $region23: #{proposal_layer_forward.1} parent=1 // pred_check_branch
      %137 = sbr.rel (0) target = $region25
    $region24: #{proposal_layer_forward.1} parent=1 // pred_region
      _
    $region25: #{proposal_layer_forward.1} parent=1 // pred_fallthru
      _
    %138 = vsyncpa [#allocation3], 1

</llo_original>
